<compile_context>
chip_gen: v5e
topology: v5e:2x2
jax: 0.10.0
libtpu: 0.0.40
codegen_flags: <defaults>
</compile_context>

<pallas_src>
import jax
import jax.numpy as jnp
from jax.experimental import pallas as pl
from jax.experimental.pallas import tpu as pltpu


def _att_kernel(x3_ref, x4_ref, x1_ref, x2_ref,
                wq3_ref, wq4_ref, wk_ref, wv_ref,
                ssum_ref, wp_ref, bias_ref, out_ref):
    """Lane-dense N==1 multi-head attention over a (TB, L) score slab."""
    # q replicated / k,v tiled onto the lane slab via the pre-expanded weights
    # (centre taps of the k=3 convs; attention scale folded into the q rows).
    qrep = (jnp.dot(x3_ref[...], wq3_ref[...], preferred_element_type=jnp.float32) +
            jnp.dot(x4_ref[...], wq4_ref[...], preferred_element_type=jnp.float32))
    ktile = jnp.dot(x1_ref[...], wk_ref[...], preferred_element_type=jnp.float32)
    vtile = jnp.dot(x2_ref[...], wv_ref[...], preferred_element_type=jnp.float32)

    # Scores.  softmax is shift-invariant and the per-row (whole-slab) max is
    # constant within every Dh-wide segment, so subtracting it is exactly the
    # per-head softmax while keeping exp() <= 1 (no -1e30 mask needed).
    s = qrep * ktile                                  # (TB, L)
    s = s - jnp.max(s, axis=-1, keepdims=True)        # XLU cross-lane reduce
    p = jnp.exp(s)                                    # EUP
    # TODO(synk): on v6e/v7x the exp could be done in bf16 for extra VPU/EUP
    # throughput; kept f32 to share one codepath with v5e.

    # Segment (per (head,row)) reductions on the MXU: ssum[col, m] = [col//Dh == m].
    denom = jnp.dot(p, ssum_ref[...], preferred_element_type=jnp.float32)        # (TB, dim)
    numer = jnp.dot(p * vtile, ssum_ref[...], preferred_element_type=jnp.float32)
    ctx = numer * pl.reciprocal(denom, approx=True)                              # (TB, dim)

    # proj "conv" (centre tap).  torch's transpose(1,2).reshape head permutation
    # and the 128-lane output padding are pre-folded into wp; store is lane-dense.
    out_ref[...] = (jnp.dot(ctx, wp_ref[...], preferred_element_type=jnp.float32)
                    + bias_ref[...])


def prepare_mult_scale_att(params, *, hidden_dim, dim, num_heads=1, dualition=2):
    """One-time constant folding of the module weights (build once, reuse)."""
    H = num_heads * dualition
    Dh = dim // H
    assert Dh * H == dim, "dim must be divisible by num_heads * dualition"
    L = H * Dh * Dh                                  # score-slab lane width
    HP = max(128, -(-hidden_dim // 128) * 128)       # lane-dense output width
    scale = hidden_dim ** (-0.5)
    # TODO(synk): at module-default sizes (dim=128 -> L=8192, hidden=2048) the
    # lane-expanded weights would not fit VMEM resident; tile heads/L onto a
    # second grid axis in that regime.

    wq_c = jnp.asarray(params["wq"], jnp.float32)[:, :, 1]   # (dim, 2*hidden)
    wk_c = jnp.asarray(params["wk"], jnp.float32)[:, :, 1]   # (dim, hidden)
    wv_c = jnp.asarray(params["wv"], jnp.float32)[:, :, 1]   # (dim, hidden)
    wp_c = jnp.asarray(params["wp"], jnp.float32)[:, :, 1]   # (hidden, dim)
    bp = jnp.asarray(params["bp"], jnp.float32)

    col = jnp.arange(L)
    qmap = col // Dh                                 # q channel  h*Dh + i
    kmap = (col // (Dh * Dh)) * Dh + (col % Dh)      # k/v channel h*Dh + j

    wq3 = (wq_c[:, :hidden_dim] * scale).T[:, qmap]  # (hidden, L), x3 part
    wq4 = (wq_c[:, hidden_dim:] * scale).T[:, qmap]  # (hidden, L), x4 part
    wk = wk_c.T[:, kmap]                             # (hidden, L)
    wv = wv_c.T[:, kmap]                             # (hidden, L)

    # 0/1 segment-sum matrix: reduces the L-wide slab to dim head-blocked cols.
    ssum = (qmap[:, None] == jnp.arange(dim)[None, :]).astype(jnp.float32)  # (L, dim)

    # proj weight with torch's (d*H + h) channel order folded into its rows,
    # zero-padded to HP output lanes so the kernel store is an unmasked vst.
    r = jnp.arange(dim)
    src = (r % Dh) * H + (r // Dh)
    wp = jnp.zeros((dim, HP), jnp.float32).at[:, :hidden_dim].set(wp_c.T[src, :])
    bias = jnp.zeros((1, HP), jnp.float32).at[:, :hidden_dim].set(bp[None, :])
    # TODO(synk): bias could be folded into wp via a ones column on ctx; kept
    # separate (one tiny resident DMA) to avoid an in-kernel lane concat.

    return dict(hidden_dim=hidden_dim, dim=dim, H=H, Dh=Dh, L=L, HP=HP,
                wq3=wq3, wq4=wq4, wk=wk, wv=wv, ssum=ssum, wp=wp, bias=bias)


def _pick_batch_tile(batch, *, hidden_dim, L, HP, dim, budget_bytes=8 << 20):
    """Largest power-of-two batch tile (multiple of 8) whose live f32
    temporaries + double-buffered in/out tiles fit the VMEM budget (sized for
    v5e's 16 MiB scoped default); tiny batches use one whole-array block."""
    if batch < 16:
        return batch
    bytes_per_row = 4 * (8 * hidden_dim + 6 * L + 3 * HP + 2 * dim)
    cap = max(8, budget_bytes // bytes_per_row)
    # keep >= 2 grid steps so v7x's second TensorCore gets work
    cap = min(cap, max(8, (batch // 16) * 8), 1024)
    tb = 8
    while tb * 2 <= cap:
        tb *= 2
    return tb


def mult_scale_att_forward(prep, x1, x2, x3, x4):
    B = x1.shape[0]
    hidden = prep["hidden_dim"]
    # The module's trailing `.reshape(B, C, 1)` only type-checks if N == 1,
    # so the k=3/pad=1 convs only ever see their centre tap (folded in prep).
    for x in (x1, x2, x3, x4):
        assert x.shape == (B, hidden, 1), x.shape
    L, HP, dim = prep["L"], prep["HP"], prep["dim"]

    # Squeeze the singleton length dim wrapper-side (keeps the kernel's lane
    # axis on the channel dim).  No concat: the four inputs feed four
    # K=hidden matmuls directly.
    xs = [x[:, :, 0].astype(jnp.float32) for x in (x3, x4, x1, x2)]

    tb = _pick_batch_tile(B, hidden_dim=hidden, L=L, HP=HP, dim=dim)
    Bp = -(-B // tb) * tb
    if Bp != B:                      # awkward B: zero-pad instead of one huge block
        xs = [jnp.pad(x, ((0, Bp - B), (0, 0))) for x in xs]
    nb = Bp // tb

    x_spec = pl.BlockSpec((tb, hidden), lambda i: (i, 0))
    const = lambda shape: pl.BlockSpec(shape, lambda i: (0, 0))   # resident

    out = pl.pallas_call(
        _att_kernel,
        out_shape=jax.ShapeDtypeStruct((Bp, HP), jnp.float32),
        grid_spec=pltpu.PrefetchScalarGridSpec(
            num_scalar_prefetch=0,
            grid=(nb,),
            in_specs=[x_spec, x_spec, x_spec, x_spec,
                      const((hidden, L)), const((hidden, L)),
                      const((hidden, L)), const((hidden, L)),
                      const((L, dim)), const((dim, HP)), const((1, HP))],
            out_specs=pl.BlockSpec((tb, HP), lambda i: (i, 0)),
        ),
        compiler_params=pltpu.CompilerParams(
            dimension_semantics=("parallel",),
            vmem_limit_bytes=32 * 1024 * 1024),
    )(*xs, prep["wq3"], prep["wq4"], prep["wk"], prep["wv"],
      prep["ssum"], prep["wp"], prep["bias"])

    return out[:B, :hidden][:, :, None]              # (B, hidden, 1)


def _reference(params, x1, x2, x3, x4, *, hidden_dim, dim, num_heads, dualition):
    """Pure-JAX mirror of the PyTorch forward (N == 1)."""
    B, c, N = x1.shape
    H = num_heads * dualition
    Dh = dim // H
    scale = hidden_dim ** (-0.5)

    def conv_mid(w, x):  # Conv1d(k=3, pad=1) at N==1 -> centre-tap matmul
        return jnp.einsum('oc,bcn->bon', w[:, :, 1], x)

    q = conv_mid(params["wq"], jnp.concatenate([x3, x4], axis=1))
    k = conv_mid(params["wk"], x1)
    v = conv_mid(params["wv"], x2)
    q = q.reshape(B, N, H, Dh).transpose(0, 2, 3, 1) * scale
    k = k.reshape(B, N, H, Dh).transpose(0, 2, 3, 1)
    v = v.reshape(B, N, H, Dh).transpose(0, 2, 3, 1)
    attn = q @ jnp.swapaxes(k, -2, -1)
    attn = jax.nn.softmax(attn, axis=-1)
    x = jnp.swapaxes(attn @ v, 1, 2).reshape(B, dim, 1)
    out = conv_mid(params["wp"], x) + params["bp"][None, :, None]
    return out


if __name__ == "__main__":
    # Small, module-consistent shapes: hidden_dim=32, dim=16, heads*dualition=2.
    hidden_dim, dim, num_heads, dualition = 32, 16, 1, 2
    B, N = 2, 1  # N must be 1 (the module's final reshape requires it)

    key = jax.random.PRNGKey(0)
    ks = jax.random.split(key, 9)
    params = {
        "wq": 0.05 * jax.random.normal(ks[0], (dim, 2 * hidden_dim, 3), jnp.float32),
        "wk": 0.05 * jax.random.normal(ks[1], (dim, hidden_dim, 3), jnp.float32),
        "wv": 0.05 * jax.random.normal(ks[2], (dim, hidden_dim, 3), jnp.float32),
        "wp": 0.05 * jax.random.normal(ks[3], (hidden_dim, dim, 3), jnp.float32),
        "bp": 0.05 * jax.random.normal(ks[4], (hidden_dim,), jnp.float32),
    }
    x1 = jax.random.normal(ks[5], (B, hidden_dim, N), jnp.float32)
    x2 = jax.random.normal(ks[6], (B, hidden_dim, N), jnp.float32)
    x3 = jax.random.normal(ks[7], (B, hidden_dim, N), jnp.float32)
    x4 = jax.random.normal(ks[8], (B, hidden_dim, N), jnp.float32)

    # Constant folding happens once; the per-call forward is just the kernel.
    prep = prepare_mult_scale_att(params, hidden_dim=hidden_dim, dim=dim,
                                  num_heads=num_heads, dualition=dualition)

    out = mult_scale_att_forward(prep, x1, x2, x3, x4)
    out = jax.block_until_ready(out)

    ref = _reference(params, x1, x2, x3, x4, hidden_dim=hidden_dim, dim=dim,
                     num_heads=num_heads, dualition=dualition)
    assert out.shape == (B, hidden_dim, 1), out.shape
    # Tolerance covers the approximate EUP reciprocal (dominant error term).
    assert jnp.allclose(out, ref, atol=2e-3, rtol=2e-3), \
        float(jnp.max(jnp.abs(out - ref)))
    print("KERNEL_OK")
</pallas_src>

<mosaic_0001>
module attributes {stable_mosaic.version = 11 : i64} {
  func.func @_att_kernel(%arg0: i32, %arg1: memref<2x32xf32, #tpu.memory_space<vmem>>, %arg2: memref<2x32xf32, #tpu.memory_space<vmem>>, %arg3: memref<2x32xf32, #tpu.memory_space<vmem>>, %arg4: memref<2x32xf32, #tpu.memory_space<vmem>>, %arg5: memref<32x128xf32, #tpu.memory_space<vmem>>, %arg6: memref<32x128xf32, #tpu.memory_space<vmem>>, %arg7: memref<32x128xf32, #tpu.memory_space<vmem>>, %arg8: memref<32x128xf32, #tpu.memory_space<vmem>>, %arg9: memref<128x16xf32, #tpu.memory_space<vmem>>, %arg10: memref<16x128xf32, #tpu.memory_space<vmem>>, %arg11: memref<1x128xf32, #tpu.memory_space<vmem>>, %arg12: memref<2x128xf32, #tpu.memory_space<vmem>>) attributes {dimension_semantics = [#tpu.dimension_semantics<parallel>], iteration_bounds = array<i64: 1>, scalar_prefetch = 0 : i64, scratch_operands = 0 : i64, tpu.core_type = #tpu.core_type<tc>, window_params = [{transform_indices = @transform_0, window_bounds = array<i64: 2, 32>}, {transform_indices = @transform_1, window_bounds = array<i64: 2, 32>}, {transform_indices = @transform_2, window_bounds = array<i64: 2, 32>}, {transform_indices = @transform_3, window_bounds = array<i64: 2, 32>}, {pipeline_mode = #tpu.pipeline_mode<synchronous>, transform_indices = @transform_4, window_bounds = array<i64: 32, 128>}, {pipeline_mode = #tpu.pipeline_mode<synchronous>, transform_indices = @transform_5, window_bounds = array<i64: 32, 128>}, {pipeline_mode = #tpu.pipeline_mode<synchronous>, transform_indices = @transform_6, window_bounds = array<i64: 32, 128>}, {pipeline_mode = #tpu.pipeline_mode<synchronous>, transform_indices = @transform_7, window_bounds = array<i64: 32, 128>}, {pipeline_mode = #tpu.pipeline_mode<synchronous>, transform_indices = @transform_8, window_bounds = array<i64: 128, 16>}, {pipeline_mode = #tpu.pipeline_mode<synchronous>, transform_indices = @transform_9, window_bounds = array<i64: 16, 128>}, {pipeline_mode = #tpu.pipeline_mode<synchronous>, transform_indices = @transform_10, window_bounds = array<i64: 1, 128>}, {transform_indices = @transform_11, window_bounds = array<i64: 2, 128>}]} {
    %c0 = arith.constant 0 : index
    %c0_0 = arith.constant 0 : index
    %0 = vector.load %arg1[%c0, %c0_0] : memref<2x32xf32, #tpu.memory_space<vmem>>, vector<2x32xf32>
    %c0_1 = arith.constant 0 : index
    %c0_2 = arith.constant 0 : index
    %1 = vector.load %arg5[%c0_1, %c0_2] : memref<32x128xf32, #tpu.memory_space<vmem>>, vector<32x128xf32>
    %cst = arith.constant dense<0.000000e+00> : vector<2x128xf32>
    %2 = tpu.matmul %0, %1, %cst {dimension_numbers = #tpu.dot_dimension_numbers<[1], [0], [0], [1], [0, 0, 1, 1], [], []>} : vector<2x32xf32>, vector<32x128xf32>, vector<2x128xf32> -> vector<2x128xf32>
    %c0_3 = arith.constant 0 : index
    %c0_4 = arith.constant 0 : index
    %3 = vector.load %arg2[%c0_3, %c0_4] : memref<2x32xf32, #tpu.memory_space<vmem>>, vector<2x32xf32>
    %c0_5 = arith.constant 0 : index
    %c0_6 = arith.constant 0 : index
    %4 = vector.load %arg6[%c0_5, %c0_6] : memref<32x128xf32, #tpu.memory_space<vmem>>, vector<32x128xf32>
    %cst_7 = arith.constant dense<0.000000e+00> : vector<2x128xf32>
    %5 = tpu.matmul %3, %4, %cst_7 {dimension_numbers = #tpu.dot_dimension_numbers<[1], [0], [0], [1], [0, 0, 1, 1], [], []>} : vector<2x32xf32>, vector<32x128xf32>, vector<2x128xf32> -> vector<2x128xf32>
    %6 = arith.addf %2, %5 : vector<2x128xf32>
    %c0_8 = arith.constant 0 : index
    %c0_9 = arith.constant 0 : index
    %7 = vector.load %arg3[%c0_8, %c0_9] : memref<2x32xf32, #tpu.memory_space<vmem>>, vector<2x32xf32>
    %c0_10 = arith.constant 0 : index
    %c0_11 = arith.constant 0 : index
    %8 = vector.load %arg7[%c0_10, %c0_11] : memref<32x128xf32, #tpu.memory_space<vmem>>, vector<32x128xf32>
    %cst_12 = arith.constant dense<0.000000e+00> : vector<2x128xf32>
    %9 = tpu.matmul %7, %8, %cst_12 {dimension_numbers = #tpu.dot_dimension_numbers<[1], [0], [0], [1], [0, 0, 1, 1], [], []>} : vector<2x32xf32>, vector<32x128xf32>, vector<2x128xf32> -> vector<2x128xf32>
    %c0_13 = arith.constant 0 : index
    %c0_14 = arith.constant 0 : index
    %10 = vector.load %arg4[%c0_13, %c0_14] : memref<2x32xf32, #tpu.memory_space<vmem>>, vector<2x32xf32>
    %c0_15 = arith.constant 0 : index
    %c0_16 = arith.constant 0 : index
    %11 = vector.load %arg8[%c0_15, %c0_16] : memref<32x128xf32, #tpu.memory_space<vmem>>, vector<32x128xf32>
    %cst_17 = arith.constant dense<0.000000e+00> : vector<2x128xf32>
    %12 = tpu.matmul %10, %11, %cst_17 {dimension_numbers = #tpu.dot_dimension_numbers<[1], [0], [0], [1], [0, 0, 1, 1], [], []>} : vector<2x32xf32>, vector<32x128xf32>, vector<2x128xf32> -> vector<2x128xf32>
    %13 = arith.mulf %6, %9 : vector<2x128xf32>
    %cst_18 = arith.constant dense<0xFF800000> : vector<2xf32>
    %14 = vector.multi_reduction <maximumf>, %13, %cst_18 [1] : vector<2x128xf32> to vector<2xf32>
    %15 = vector.shape_cast %14 : vector<2xf32> to vector<2x1xf32>
    %16 = vector.broadcast %15 : vector<2x1xf32> to vector<2x128xf32>
    %17 = arith.subf %13, %16 : vector<2x128xf32>
    %18 = math.exp %17 : vector<2x128xf32>
    %c0_19 = arith.constant 0 : index
    %c0_20 = arith.constant 0 : index
    %19 = vector.load %arg9[%c0_19, %c0_20] : memref<128x16xf32, #tpu.memory_space<vmem>>, vector<128x16xf32>
    %cst_21 = arith.constant dense<0.000000e+00> : vector<2x16xf32>
    %20 = tpu.matmul %18, %19, %cst_21 {dimension_numbers = #tpu.dot_dimension_numbers<[1], [0], [0], [1], [0, 0, 1, 1], [], []>} : vector<2x128xf32>, vector<128x16xf32>, vector<2x16xf32> -> vector<2x16xf32>
    %21 = arith.mulf %18, %12 : vector<2x128xf32>
    %c0_22 = arith.constant 0 : index
    %c0_23 = arith.constant 0 : index
    %22 = vector.load %arg9[%c0_22, %c0_23] : memref<128x16xf32, #tpu.memory_space<vmem>>, vector<128x16xf32>
    %cst_24 = arith.constant dense<0.000000e+00> : vector<2x16xf32>
    %23 = tpu.matmul %21, %22, %cst_24 {dimension_numbers = #tpu.dot_dimension_numbers<[1], [0], [0], [1], [0, 0, 1, 1], [], []>} : vector<2x128xf32>, vector<128x16xf32>, vector<2x16xf32> -> vector<2x16xf32>
    %24 = tpu.reciprocal %20 {approx = true} : vector<2x16xf32> -> vector<2x16xf32>
    %25 = arith.mulf %23, %24 : vector<2x16xf32>
    %c0_25 = arith.constant 0 : index
    %c0_26 = arith.constant 0 : index
    %26 = vector.load %arg10[%c0_25, %c0_26] : memref<16x128xf32, #tpu.memory_space<vmem>>, vector<16x128xf32>
    %cst_27 = arith.constant dense<0.000000e+00> : vector<2x128xf32>
    %27 = tpu.matmul %25, %26, %cst_27 {dimension_numbers = #tpu.dot_dimension_numbers<[1], [0], [0], [1], [0, 0, 1, 1], [], []>} : vector<2x16xf32>, vector<16x128xf32>, vector<2x128xf32> -> vector<2x128xf32>
    %c0_28 = arith.constant 0 : index
    %c0_29 = arith.constant 0 : index
    %28 = vector.load %arg11[%c0_28, %c0_29] : memref<1x128xf32, #tpu.memory_space<vmem>>, vector<1x128xf32>
    %29 = vector.broadcast %28 : vector<1x128xf32> to vector<2x128xf32>
    %30 = arith.addf %27, %29 : vector<2x128xf32>
    %c0_30 = arith.constant 0 : index
    %c0_31 = arith.constant 0 : index
    %31 = vector.load %arg12[%c0_30, %c0_31] : memref<2x128xf32, #tpu.memory_space<vmem>>, vector<2x128xf32>
    tpu.vector_store %arg12[%c0_30, %c0_31], %30 {strides = array<i32>} : memref<2x128xf32, #tpu.memory_space<vmem>>, vector<2x128xf32>,
    return
  }
  func.func @transform_0(%arg0: i32) -> (i32, i32) {
    %c0_i32 = arith.constant 0 : i32
    %c0_i32_0 = arith.constant 0 : i32
    return %arg0, %c0_i32 : i32, i32
  }
  func.func @transform_1(%arg0: i32) -> (i32, i32) {
    %c0_i32 = arith.constant 0 : i32
    %c0_i32_0 = arith.constant 0 : i32
    return %arg0, %c0_i32 : i32, i32
  }
  func.func @transform_2(%arg0: i32) -> (i32, i32) {
    %c0_i32 = arith.constant 0 : i32
    %c0_i32_0 = arith.constant 0 : i32
    return %arg0, %c0_i32 : i32, i32
  }
  func.func @transform_3(%arg0: i32) -> (i32, i32) {
    %c0_i32 = arith.constant 0 : i32
    %c0_i32_0 = arith.constant 0 : i32
    return %arg0, %c0_i32 : i32, i32
  }
  func.func @transform_4(%arg0: i32) -> (i32, i32) {
    %c0_i32 = arith.constant 0 : i32
    %c0_i32_0 = arith.constant 0 : i32
    %c0_i32_1 = arith.constant 0 : i32
    return %c0_i32, %c0_i32_0 : i32, i32
  }
  func.func @transform_5(%arg0: i32) -> (i32, i32) {
    %c0_i32 = arith.constant 0 : i32
    %c0_i32_0 = arith.constant 0 : i32
    %c0_i32_1 = arith.constant 0 : i32
    return %c0_i32, %c0_i32_0 : i32, i32
  }
  func.func @transform_6(%arg0: i32) -> (i32, i32) {
    %c0_i32 = arith.constant 0 : i32
    %c0_i32_0 = arith.constant 0 : i32
    %c0_i32_1 = arith.constant 0 : i32
    return %c0_i32, %c0_i32_0 : i32, i32
  }
  func.func @transform_7(%arg0: i32) -> (i32, i32) {
    %c0_i32 = arith.constant 0 : i32
    %c0_i32_0 = arith.constant 0 : i32
    %c0_i32_1 = arith.constant 0 : i32
    return %c0_i32, %c0_i32_0 : i32, i32
  }
  func.func @transform_8(%arg0: i32) -> (i32, i32) {
    %c0_i32 = arith.constant 0 : i32
    %c0_i32_0 = arith.constant 0 : i32
    %c0_i32_1 = arith.constant 0 : i32
    return %c0_i32, %c0_i32_0 : i32, i32
  }
  func.func @transform_9(%arg0: i32) -> (i32, i32) {
    %c0_i32 = arith.constant 0 : i32
    %c0_i32_0 = arith.constant 0 : i32
    %c0_i32_1 = arith.constant 0 : i32
    return %c0_i32, %c0_i32_0 : i32, i32
  }
  func.func @transform_10(%arg0: i32) -> (i32, i32) {
    %c0_i32 = arith.constant 0 : i32
    %c0_i32_0 = arith.constant 0 : i32
    %c0_i32_1 = arith.constant 0 : i32
    return %c0_i32, %c0_i32_0 : i32, i32
  }
  func.func @transform_11(%arg0: i32) -> (i32, i32) {
    %c0_i32 = arith.constant 0 : i32
    %c0_i32_0 = arith.constant 0 : i32
    return %arg0, %c0_i32 : i32, i32
  }
}

</mosaic_0001>

<llo_original>
// kernel: tpu_custom_call.1
$region0: #{tpu_custom_call.1}
  #allocation0 [shape = 'u32[]', space=smem, size = 0x4, offset = 0x4, fixed_abs, tag = 'smem constant byte address 0x4 - core index']
  #allocation1 [shape = 'u32[72,128]{1,0:T(1,128)}', space=vmem, size = 0x9000, scoped, tag = 'internal scratch']
  %s0 = inlined_call_operand.hbm [shape: f32[2,32], index: 0, kind: input, shape index: {}]
  %s1 = inlined_call_operand.hbm [shape: f32[2,32], index: 1, kind: input, shape index: {}]
  %s2 = inlined_call_operand.hbm [shape: f32[2,32], index: 2, kind: input, shape index: {}]
  %s3 = inlined_call_operand.hbm [shape: f32[2,32], index: 3, kind: input, shape index: {}]
  %s4 = inlined_call_operand.vmem [shape: f32[32,128], index: 4, kind: input, shape index: {}]
  %s5 = inlined_call_operand.vmem [shape: f32[32,128], index: 5, kind: input, shape index: {}]
  %s6 = inlined_call_operand.vmem [shape: f32[32,128], index: 6, kind: input, shape index: {}]
  %s7 = inlined_call_operand.vmem [shape: f32[32,128], index: 7, kind: input, shape index: {}]
  %s8 = inlined_call_operand.vmem [shape: f32[128,16], index: 8, kind: input, shape index: {}]
  %s9 = inlined_call_operand.vmem [shape: f32[16,128], index: 9, kind: input, shape index: {}]
  %s10 = inlined_call_operand.vmem [shape: f32[1,128], index: 10, kind: input, shape index: {}]
  %s11 = inlined_call_operand.hbm [shape: f32[2,128], index: 11, kind: output, shape index: {}]
  %s12 = sld [smem:[#allocation0]]
  $region70: #{tpu_custom_call.1} parent=0
    _
  %s14 = ssub.s32 1, %s12
  %s15 = scalar_select 0, %s14, %s12
  $region1: #{tpu_custom_call.1} parent=0
    #allocation2 [shape = 'u8[1024]{0}', space=vmem, size = 0x400, scoped, tag = 'input window, operand 0, single buffered']
    #allocation3 [shape = 's32[1]{0}', space=sflag, size = 0x4, scoped, tag = 'scoped memory for tpu_custom_call.1']
    #allocation4 [shape = 's32[1]{0}', space=sflag, size = 0x4, scoped, tag = 'scoped memory for tpu_custom_call.1']
    #allocation5 [shape = 'u8[1024]{0}', space=vmem, size = 0x400, scoped, tag = 'input window, operand 1, single buffered']
    #allocation6 [shape = 's32[1]{0}', space=sflag, size = 0x4, scoped, tag = 'scoped memory for tpu_custom_call.1']
    #allocation7 [shape = 'u8[1024]{0}', space=vmem, size = 0x400, scoped, tag = 'input window, operand 2, single buffered']
    #allocation8 [shape = 'u8[1024]{0}', space=vmem, size = 0x400, scoped, tag = 'input window, operand 3, single buffered']
    #allocation9 [shape = 's32[1]{0}', space=sflag, size = 0x4, scoped, tag = 'scoped memory for tpu_custom_call.1']
    #allocation10 [shape = 'u8[1024]{0}', space=vmem, size = 0x400, scoped, tag = 'output window, operand 0, single buffered']
    %16 = vsyncpa [#allocation3], 0
    %17 = vsyncpa [#allocation6], 0
    %18 = vsyncpa [#allocation9], 0
    %19 = vsyncpa [#allocation4], 0
    // Predicated region
    $region2: #{tpu_custom_call.1} parent=1 // pred_check
      _
    $region3: #{tpu_custom_call.1} parent=1 // pred_check_branch
      %21 = sbr.rel (0) target = $region5
    $region4: #{tpu_custom_call.1} parent=1 // pred_region
      %23 = vsyncadd [#allocation3], 0
      %s25 = sshll.u32 %s0, 4
      %s26 = int_to_ptr.hbm [resolvable:$true] %s25
      %s27 = sshll.u32 [#allocation2], 4
      %s28 = int_to_ptr.vmem [resolvable:$true] %s27
      %30 = dma.hbm_to_vmem [thread:$0]  %s26, 32, %s28, [#allocation3]
    $region5: #{tpu_custom_call.1} parent=1 // pred_fallthru
      _
    // Predicated region
    $region6: #{tpu_custom_call.1} parent=1 // pred_check
      _
    $region7: #{tpu_custom_call.1} parent=1 // pred_check_branch
      %32 = sbr.rel (0) target = $region9
    $region8: #{tpu_custom_call.1} parent=1 // pred_region
      %34 = vsyncadd [#allocation6], 0
      %s36 = sshll.u32 %s1, 4
      %s37 = int_to_ptr.hbm [resolvable:$true] %s36
      %s38 = sshll.u32 [#allocation5], 4
      %s39 = int_to_ptr.vmem [resolvable:$true] %s38
      %41 = dma.hbm_to_vmem [thread:$0]  %s37, 32, %s39, [#allocation6]
    $region9: #{tpu_custom_call.1} parent=1 // pred_fallthru
      _
    // Predicated region
    $region10: #{tpu_custom_call.1} parent=1 // pred_check
      _
    $region11: #{tpu_custom_call.1} parent=1 // pred_check_branch
      %43 = sbr.rel (0) target = $region13
    $region12: #{tpu_custom_call.1} parent=1 // pred_region
      %45 = vsyncadd [#allocation6], 0
      %s47 = sshll.u32 %s2, 4
      %s48 = int_to_ptr.hbm [resolvable:$true] %s47
      %s49 = sshll.u32 [#allocation7], 4
      %s50 = int_to_ptr.vmem [resolvable:$true] %s49
      %52 = dma.hbm_to_vmem [thread:$0]  %s48, 32, %s50, [#allocation6]
    $region13: #{tpu_custom_call.1} parent=1 // pred_fallthru
      _
    // Predicated region
    $region14: #{tpu_custom_call.1} parent=1 // pred_check
      _
    $region15: #{tpu_custom_call.1} parent=1 // pred_check_branch
      %54 = sbr.rel (0) target = $region17
    $region16: #{tpu_custom_call.1} parent=1 // pred_region
      %56 = vsyncadd [#allocation9], 0
      %s58 = sshll.u32 %s3, 4
      %s59 = int_to_ptr.hbm [resolvable:$true] %s58
      %s60 = sshll.u32 [#allocation8], 4
      %s61 = int_to_ptr.vmem [resolvable:$true] %s60
      %63 = dma.hbm_to_vmem [thread:$0]  %s59, 32, %s61, [#allocation9]
    $region17: #{tpu_custom_call.1} parent=1 // pred_fallthru
      _
    // Predicated region
    $region18: #{tpu_custom_call.1} parent=1 // pred_check
      _
    $region19: #{tpu_custom_call.1} parent=1 // pred_check_branch
      %65 = sbr.rel (0) target = $region21
    $region20: #{tpu_custom_call.1} parent=1 // pred_region
      _
    $region21: #{tpu_custom_call.1} parent=1 // pred_fallthru
      _
    // Predicated region
    $region22: #{tpu_custom_call.1} parent=1 // pred_check
      _
    $region23: #{tpu_custom_call.1} parent=1 // pred_check_branch
      %67 = sbr.rel (0) target = $region25
    $region24: #{tpu_custom_call.1} parent=1 // pred_region
      _
    $region25: #{tpu_custom_call.1} parent=1 // pred_fallthru
      _
    // Predicated region
    $region26: #{tpu_custom_call.1} parent=1 // pred_check
      _
    $region27: #{tpu_custom_call.1} parent=1 // pred_check_branch
      %69 = sbr.rel (0) target = $region29
    $region28: #{tpu_custom_call.1} parent=1 // pred_region
      _
    $region29: #{tpu_custom_call.1} parent=1 // pred_fallthru
      _
    // Predicated region
    $region30: #{tpu_custom_call.1} parent=1 // pred_check
      _
    $region31: #{tpu_custom_call.1} parent=1 // pred_check_branch
      %71 = sbr.rel (0) target = $region33
    $region32: #{tpu_custom_call.1} parent=1 // pred_region
      _
    $region33: #{tpu_custom_call.1} parent=1 // pred_fallthru
      _
    // Predicated region
    $region34: #{tpu_custom_call.1} parent=1 // pred_check
      _
    $region35: #{tpu_custom_call.1} parent=1 // pred_check_branch
      %73 = sbr.rel (0) target = $region37
    $region36: #{tpu_custom_call.1} parent=1 // pred_region
      _
    $region37: #{tpu_custom_call.1} parent=1 // pred_fallthru
      _
    // Predicated region
    $region38: #{tpu_custom_call.1} parent=1 // pred_check
      _
    $region39: #{tpu_custom_call.1} parent=1 // pred_check_branch
      %75 = sbr.rel (0) target = $region41
    $region40: #{tpu_custom_call.1} parent=1 // pred_region
      _
    $region41: #{tpu_custom_call.1} parent=1 // pred_fallthru
      _
    // Predicated region
    $region42: #{tpu_custom_call.1} parent=1 // pred_check
      _
    $region43: #{tpu_custom_call.1} parent=1 // pred_check_branch
      %77 = sbr.rel (0) target = $region45
    $region44: #{tpu_custom_call.1} parent=1 // pred_region
      _
    $region45: #{tpu_custom_call.1} parent=1 // pred_fallthru
      _
    // Predicated region
    $region46: #{tpu_custom_call.1} parent=1 // pred_check
      _
    $region47: #{tpu_custom_call.1} parent=1 // pred_check_branch
      %79 = sbr.rel (0) target = $region49
    $region48: #{tpu_custom_call.1} parent=1 // pred_region
      %81 = dma.done [#allocation3], 32
    $region49: #{tpu_custom_call.1} parent=1 // pred_fallthru
      _
    // Predicated region
    $region50: #{tpu_custom_call.1} parent=1 // pred_check
      _
    $region51: #{tpu_custom_call.1} parent=1 // pred_check_branch
      %83 = sbr.rel (0) target = $region53
    $region52: #{tpu_custom_call.1} parent=1 // pred_region
      %85 = dma.done [#allocation6], 32
    $region53: #{tpu_custom_call.1} parent=1 // pred_fallthru
      _
    // Predicated region
    $region54: #{tpu_custom_call.1} parent=1 // pred_check
      _
    $region55: #{tpu_custom_call.1} parent=1 // pred_check_branch
      %87 = sbr.rel (0) target = $region57
    $region56: #{tpu_custom_call.1} parent=1 // pred_region
      %89 = dma.done [#allocation6], 32
    $region57: #{tpu_custom_call.1} parent=1 // pred_fallthru
      _
    // Predicated region
    $region58: #{tpu_custom_call.1} parent=1 // pred_check
      _
    $region59: #{tpu_custom_call.1} parent=1 // pred_check_branch
      %91 = sbr.rel (0) target = $region61
    $region60: #{tpu_custom_call.1} parent=1 // pred_region
      %93 = dma.done [#allocation9], 32
    $region61: #{tpu_custom_call.1} parent=1 // pred_fallthru
      _
    %v94 = vld [vmem:[#allocation2] sm:$0x3]
    %v95 = vld [vmem:[%s4] sm:$0xff]
    %v96 = vld [vmem:[%s4 + $0x8] sm:$0xff]
    %v97 = vld [vmem:[%s4 + $0x10] sm:$0xff]
    %v98 = vld [vmem:[%s4 + $0x18] sm:$0xff]
    %v99 = vld [vmem:[#allocation5] sm:$0x3]
    %v100 = vld [vmem:[%s5] sm:$0xff]
    %v101 = vld [vmem:[%s5 + $0x8] sm:$0xff]
    %v102 = vld [vmem:[%s5 + $0x10] sm:$0xff]
    %v103 = vld [vmem:[%s5 + $0x18] sm:$0xff]
    %vm104 = vcmask 261120
    %v106 = vsel %vm104, %v99, 0
    %108 = vmatpush.msra.mxu0 0.0
    %109 = vmatpush.msra.mxu0 0.0
    %110 = vmatpush.msra.mxu0 0.0
    %111 = vmatpush.msra.mxu0 0.0
    %112 = vmatpush.msra.mxu0 0.0
    %113 = vmatpush.msra.mxu0 0.0
    %114 = vmatpush.msra.mxu0 0.0
    %115 = vmatpush.msra.mxu0 0.0
    %116 = vmatpush.msra.mxu0 0.0
    %117 = vmatpush.msra.mxu0 0.0
    %118 = vmatpush.msra.mxu0 0.0
    %119 = vmatpush.msra.mxu0 0.0
    %120 = vmatpush.msra.mxu0 %v103
    %121 = vmatpush.msra.mxu0 %v102
    %122 = vmatpush.msra.mxu0 %v101
    %123 = vmatpush.msra.mxu0 %v100
    %124 = vmatmul.f32.gmra.mxu0 %v106
    %v125 = vpop.f32.mrf.mxu0
    %v126 = vadd.f32 0.0, %v125
    %127 = vdwg.mxu0
    %v129 = vsel %vm104, %v94, 0
    %131 = vmatpush.msra.mxu0 0.0
    %132 = vmatpush.msra.mxu0 0.0
    %133 = vmatpush.msra.mxu0 0.0
    %134 = vmatpush.msra.mxu0 0.0
    %135 = vmatpush.msra.mxu0 0.0
    %136 = vmatpush.msra.mxu0 0.0
    %137 = vmatpush.msra.mxu0 0.0
    %138 = vmatpush.msra.mxu0 0.0
    %139 = vmatpush.msra.mxu0 0.0
    %140 = vmatpush.msra.mxu0 0.0
    %141 = vmatpush.msra.mxu0 0.0
    %142 = vmatpush.msra.mxu0 0.0
    %143 = vmatpush.msra.mxu0 %v98
    %144 = vmatpush.msra.mxu0 %v97
    %145 = vmatpush.msra.mxu0 %v96
    %146 = vmatpush.msra.mxu0 %v95
    %147 = vmatmul.f32.gmra.mxu0 %v129
    %v148 = vpop.f32.mrf.mxu0
    %v149 = vadd.f32 %v126, %v148
    %150 = vdwg.mxu0
    %v151 = vld [vmem:[#allocation7] sm:$0x3]
    %v152 = vld [vmem:[%s6] sm:$0xff]
    %v153 = vld [vmem:[%s6 + $0x8] sm:$0xff]
    %v154 = vld [vmem:[%s6 + $0x10] sm:$0xff]
    %v155 = vld [vmem:[%s6 + $0x18] sm:$0xff]
    %v157 = vsel %vm104, %v151, 0
    %159 = vmatpush.msra.mxu0 0.0
    %160 = vmatpush.msra.mxu0 0.0
    %161 = vmatpush.msra.mxu0 0.0
    %162 = vmatpush.msra.mxu0 0.0
    %163 = vmatpush.msra.mxu0 0.0
    %164 = vmatpush.msra.mxu0 0.0
    %165 = vmatpush.msra.mxu0 0.0
    %166 = vmatpush.msra.mxu0 0.0
    %167 = vmatpush.msra.mxu0 0.0
    %168 = vmatpush.msra.mxu0 0.0
    %169 = vmatpush.msra.mxu0 0.0
    %170 = vmatpush.msra.mxu0 0.0
    %171 = vmatpush.msra.mxu0 %v155
    %172 = vmatpush.msra.mxu0 %v154
    %173 = vmatpush.msra.mxu0 %v153
    %174 = vmatpush.msra.mxu0 %v152
    %175 = vmatmul.f32.gmra.mxu0 %v157
    %v176 = vpop.f32.mrf.mxu0
    %v177 = vadd.f32 0.0, %v176
    %178 = vdwg.mxu0
    %v179 = vld [vmem:[#allocation8] sm:$0x3]
    %v180 = vld [vmem:[%s7] sm:$0xff]
    %v181 = vld [vmem:[%s7 + $0x8] sm:$0xff]
    %v182 = vld [vmem:[%s7 + $0x10] sm:$0xff]
    %v183 = vld [vmem:[%s7 + $0x18] sm:$0xff]
    %v185 = vsel %vm104, %v179, 0
    %187 = vmatpush.msra.mxu0 0.0
    %188 = vmatpush.msra.mxu0 0.0
    %189 = vmatpush.msra.mxu0 0.0
    %190 = vmatpush.msra.mxu0 0.0
    %191 = vmatpush.msra.mxu0 0.0
    %192 = vmatpush.msra.mxu0 0.0
    %193 = vmatpush.msra.mxu0 0.0
    %194 = vmatpush.msra.mxu0 0.0
    %195 = vmatpush.msra.mxu0 0.0
    %196 = vmatpush.msra.mxu0 0.0
    %197 = vmatpush.msra.mxu0 0.0
    %198 = vmatpush.msra.mxu0 0.0
    %199 = vmatpush.msra.mxu0 %v183
    %200 = vmatpush.msra.mxu0 %v182
    %201 = vmatpush.msra.mxu0 %v181
    %202 = vmatpush.msra.mxu0 %v180
    %203 = vmatmul.f32.gmra.mxu0 %v185
    %v204 = vpop.f32.mrf.mxu0
    %v205 = vadd.f32 0.0, %v204
    %206 = vdwg.mxu0
    %v207 = vmul.f32 %v149, %v177
    %vm208 = vcmask 1041408
    %v209 = vsel %vm208, %v207, -inf
    %210 = vmax.xlane.f32.xlu0 %v209
    %v211 = vpop.xlane.xlu0 %210
    %v212 = vsub.f32 %v207, %v211
    %v213 = vmul.f32 %v212, 1.442695
    %v214 = vpow.pop %v213
    %v215 = vld [vmem:[%s8] sm:$0xff]
    %v216 = vld [vmem:[%s8 + $0x8] sm:$0xff]
    %v217 = vld [vmem:[%s8 + $0x10] sm:$0xff]
    %v218 = vld [vmem:[%s8 + $0x18] sm:$0xff]
    %v219 = vld [vmem:[%s8 + $0x20] sm:$0xff]
    %v220 = vld [vmem:[%s8 + $0x28] sm:$0xff]
    %v221 = vld [vmem:[%s8 + $0x30] sm:$0xff]
    %v222 = vld [vmem:[%s8 + $0x38] sm:$0xff]
    %v223 = vld [vmem:[%s8 + $0x40] sm:$0xff]
    %v224 = vld [vmem:[%s8 + $0x48] sm:$0xff]
    %v225 = vld [vmem:[%s8 + $0x50] sm:$0xff]
    %v226 = vld [vmem:[%s8 + $0x58] sm:$0xff]
    %v227 = vld [vmem:[%s8 + $0x60] sm:$0xff]
    %v228 = vld [vmem:[%s8 + $0x68] sm:$0xff]
    %v229 = vld [vmem:[%s8 + $0x70] sm:$0xff]
    %v230 = vld [vmem:[%s8 + $0x78] sm:$0xff]
    %231 = vmatpush.msra.mxu0 %v230
    %232 = vmatpush.msra.mxu0 %v229
    %233 = vmatpush.msra.mxu0 %v228
    %234 = vmatpush.msra.mxu0 %v227
    %235 = vmatpush.msra.mxu0 %v226
    %236 = vmatpush.msra.mxu0 %v225
    %237 = vmatpush.msra.mxu0 %v224
    %238 = vmatpush.msra.mxu0 %v223
    %239 = vmatpush.msra.mxu0 %v222
    %240 = vmatpush.msra.mxu0 %v221
    %241 = vmatpush.msra.mxu0 %v220
    %242 = vmatpush.msra.mxu0 %v219
    %243 = vmatpush.msra.mxu0 %v218
    %244 = vmatpush.msra.mxu0 %v217
    %245 = vmatpush.msra.mxu0 %v216
    %246 = vmatpush.msra.mxu0 %v215
    %247 = vmatmul.f32.gmra.mxu0 %v214
    %v248 = vpop.f32.mrf.mxu0
    %v249 = vadd.f32 0.0, %v248
    %250 = vdwg.mxu0
    %v251 = vmul.f32 %v214, %v205
    %252 = vmatpush.msra.mxu0 %v230
    %253 = vmatpush.msra.mxu0 %v229
    %254 = vmatpush.msra.mxu0 %v228
    %255 = vmatpush.msra.mxu0 %v227
    %256 = vmatpush.msra.mxu0 %v226
    %257 = vmatpush.msra.mxu0 %v225
    %258 = vmatpush.msra.mxu0 %v224
    %259 = vmatpush.msra.mxu0 %v223
    %260 = vmatpush.msra.mxu0 %v222
    %261 = vmatpush.msra.mxu0 %v221
    %262 = vmatpush.msra.mxu0 %v220
    %263 = vmatpush.msra.mxu0 %v219
    %264 = vmatpush.msra.mxu0 %v218
    %265 = vmatpush.msra.mxu0 %v217
    %266 = vmatpush.msra.mxu0 %v216
    %267 = vmatpush.msra.mxu0 %v215
    %268 = vmatmul.f32.gmra.mxu0 %v251
    %v269 = vpop.f32.mrf.mxu0
    %v270 = vadd.f32 0.0, %v269
    %271 = vdwg.mxu0
    %v272 = vrcp.pop %v249
    %v273 = vmul.f32 %v270, %v272
    %v274 = vld [vmem:[%s9] sm:$0xff]
    %v275 = vld [vmem:[%s9 + $0x8] sm:$0xff]
    %v276 = vld [vmem:[%s10] sm:$0x1]
    %v278 = vperm.slane %v276, 0
    %vm280 = vcmask 130048
    %v282 = vsel %vm280, %v273, 0
    %284 = vmatpush.msra.mxu0 0.0
    %285 = vmatpush.msra.mxu0 0.0
    %286 = vmatpush.msra.mxu0 0.0
    %287 = vmatpush.msra.mxu0 0.0
    %288 = vmatpush.msra.mxu0 0.0
    %289 = vmatpush.msra.mxu0 0.0
    %290 = vmatpush.msra.mxu0 0.0
    %291 = vmatpush.msra.mxu0 0.0
    %292 = vmatpush.msra.mxu0 0.0
    %293 = vmatpush.msra.mxu0 0.0
    %294 = vmatpush.msra.mxu0 0.0
    %295 = vmatpush.msra.mxu0 0.0
    %296 = vmatpush.msra.mxu0 0.0
    %297 = vmatpush.msra.mxu0 0.0
    %298 = vmatpush.msra.mxu0 %v275
    %299 = vmatpush.msra.mxu0 %v274
    %300 = vmatmul.f32.gmra.mxu0 %v282
    %v301 = vpop.f32.mrf.mxu0
    %v302 = vadd.f32 %v278, %v301
    %303 = vdwg.mxu0
    %304 = vst [vmem:[#allocation10] sm:$0x3] %v302
    // Predicated region
    $region62: #{tpu_custom_call.1} parent=1 // pred_check
      _
    $region63: #{tpu_custom_call.1} parent=1 // pred_check_branch
      %306 = sbr.rel (0) target = $region65
    $region64: #{tpu_custom_call.1} parent=1 // pred_region
      %308 = vsyncadd [#allocation4], 0
      %s310 = sshll.u32 [#allocation10], 4
      %s311 = int_to_ptr.vmem [resolvable:$true] %s310
      %s312 = sshll.u32 %s11, 4
      %s313 = int_to_ptr.hbm [resolvable:$true] %s312
      %315 = dma.vmem_to_hbm [thread:$0]  %s311, 32, %s313, [#allocation4]
    $region65: #{tpu_custom_call.1} parent=1 // pred_fallthru
      _
    // Predicated region
    $region66: #{tpu_custom_call.1} parent=1 // pred_check
      _
    $region67: #{tpu_custom_call.1} parent=1 // pred_check_branch
      %317 = sbr.rel (0) target = $region69
    $region68: #{tpu_custom_call.1} parent=1 // pred_region
      %319 = dma.done [#allocation4], 32
    $region69: #{tpu_custom_call.1} parent=1 // pred_fallthru
      _
    %320 = vsyncpa [#allocation3], 1
    %321 = vsyncpa [#allocation6], 1
    %322 = vsyncpa [#allocation9], 1
    %323 = vsyncpa [#allocation4], 1

</llo_original>
